<compile_context>
chip_gen: v5e
topology: v5e:2x2
jax: 0.10.0
libtpu: 0.0.40
codegen_flags: <defaults>
</compile_context>

<pallas_src>
import numpy as np
import jax
import jax.numpy as jnp
from jax.experimental import pallas as pl
from jax.experimental.pallas import tpu as pltpu


# ----------------------------------------------------------------------------
# Constant setup (plain numpy glue): separable fold operators + inverse mask
# ----------------------------------------------------------------------------
def build_fold_operators(patch_size: int, stride: int, img_size: int):
    """Returns (R_h, R_w^T, inv_mask) as float32 numpy arrays."""
    Ph = (img_size - patch_size) // stride + 1
    H = W = img_size
    Kh = Ph * patch_size

    p = np.arange(Ph)[:, None]            # (Ph, 1)
    i = np.arange(patch_size)[None, :]    # (1, ps)
    rows = (p * stride + i).ravel()       # row index hit by column k = p*ps + i

    Rh = np.zeros((H, Kh), dtype=np.float32)
    Rh[rows, np.arange(Kh)] = 1.0
    Rw = Rh                               # square image, same patch grid both dims

    # overlap count factorizes: mask[h, w] = ch[h] * cw[w]
    ch = Rh.sum(axis=1)                   # (H,)
    cw = Rw.sum(axis=1)                   # (W,)
    mask = ch[:, None] * cw[None, :]      # (H, W)
    with np.errstate(divide="ignore"):
        inv_mask = (1.0 / mask).astype(np.float32)   # inf where uncovered (see note)

    return Rh, np.ascontiguousarray(Rw.T), inv_mask


# ----------------------------------------------------------------------------
# Pallas kernel: separable fold (two small matmuls) + inv-mask multiply
# ----------------------------------------------------------------------------
def fold_kernel(y_ref, rh_ref, rwt_ref, invm_ref, o_ref):
    # y_ref:    (1, Ph*ps, Pw*ps)  patch data for one batch, (p*ps+i, q*ps+j) layout
    # rh_ref:   (H, Ph*ps)         row scatter operator (resident across grid)
    # rwt_ref:  (Pw*ps, W)         column scatter operator, pre-transposed (resident)
    # invm_ref: (H, W)             1 / overlap-count  (resident)
    # o_ref:    (1, H, W)
    t = jnp.dot(rh_ref[...], y_ref[0], preferred_element_type=jnp.float32)    # (H, Pw*ps)
    out = jnp.dot(t, rwt_ref[...], preferred_element_type=jnp.float32)        # (H, W)
    o_ref[0] = (out * invm_ref[...]).astype(o_ref.dtype)


def patch2im_pallas(y, Rh, RwT, inv_mask, img_size):
    B, PHps, PWps = y.shape
    H = W = img_size

    out = pl.pallas_call(
        fold_kernel,
        out_shape=jax.ShapeDtypeStruct((B, H, W), jnp.float32),
        grid_spec=pltpu.PrefetchScalarGridSpec(
            num_scalar_prefetch=0,
            grid=(B,),
            in_specs=[
                pl.BlockSpec((1, PHps, PWps), lambda b: (b, 0, 0)),  # Y_b (per step)
                pl.BlockSpec((H, PHps), lambda b: (0, 0)),           # R_h   (resident)
                pl.BlockSpec((PWps, W), lambda b: (0, 0)),           # R_w^T (resident)
                pl.BlockSpec((H, W), lambda b: (0, 0)),              # inv_mask (resident)
            ],
            out_specs=pl.BlockSpec((1, H, W), lambda b: (b, 0, 0)),
        ),
        compiler_params=pltpu.CompilerParams(
            dimension_semantics=("parallel",)),   # lets v7x megacore split the batch
    )(y, Rh, RwT, inv_mask)
    return out.reshape(B, 1, H, W)


# ----------------------------------------------------------------------------
# Module wrapper (mirrors Patch2Im: builds the non-trainable operators in __init__)
# ----------------------------------------------------------------------------
class Patch2ImPallas:
    def __init__(self, patch_size: int, stride: int, img_size: int):
        self.patch_size = patch_size
        self.stride = stride
        self.img_size = img_size
        self.Ph = (img_size - patch_size) // stride + 1
        Rh, RwT, inv_mask = build_fold_operators(patch_size, stride, img_size)
        self.Rh = jnp.asarray(Rh)              # (H, Ph*ps)
        self.RwT = jnp.asarray(RwT)            # (Pw*ps, W)
        self.inv_mask = jnp.asarray(inv_mask)  # (H, W)

    def __call__(self, x):
        # x: (B, Ph*Pw, patch_size**2)  -- same contiguous order as torch .view()
        B = x.shape[0]
        ps, Ph = self.patch_size, self.Ph
        # Y[b, p*ps+i, q*ps+j] = x[b, p*Pw+q, i*ps+j]   (layout plumbing in plain JAX)
        y = x.reshape(B, Ph, Ph, ps, ps)
        y = jnp.transpose(y, (0, 1, 3, 2, 4)).reshape(B, Ph * ps, Ph * ps)
        y = y.astype(jnp.float32)
        return patch2im_pallas(y, self.Rh, self.RwT, self.inv_mask, self.img_size)


# ----------------------------------------------------------------------------
# Pure numpy reference (mirrors torch patch2img + mask divide) for validation
# ----------------------------------------------------------------------------
def ref_patch2im(x_np, patch_size, stride, img_size):
    B = x_np.shape[0]
    Ph = (img_size - patch_size) // stride + 1
    y = x_np.reshape(B, 1, Ph, Ph, patch_size, patch_size)
    out = np.zeros((B, 1, img_size, img_size), np.float32)
    cnt = np.zeros((1, 1, img_size, img_size), np.float32)
    for p in range(Ph):
        for q in range(Ph):
            for i in range(patch_size):
                for j in range(patch_size):
                    out[:, 0, p * stride + i, q * stride + j] += y[:, 0, p, q, i, j]
                    cnt[0, 0, p * stride + i, q * stride + j] += 1.0
    return out / cnt


if __name__ == "__main__":
    # Small config: patch_size=4, stride=2, img_size=16 -> Ph=Pw=7
    patch_size, stride, img_size = 4, 2, 16
    Ph = (img_size - patch_size) // stride + 1
    B = 2

    key = jax.random.PRNGKey(0)
    x = jax.random.normal(key, (B, Ph * Ph, patch_size * patch_size), dtype=jnp.float32)

    module = Patch2ImPallas(patch_size, stride, img_size)
    out = module(x)
    out = jax.block_until_ready(out)

    ref = ref_patch2im(np.asarray(x), patch_size, stride, img_size)
    assert out.shape == (B, 1, img_size, img_size), out.shape
    np.testing.assert_allclose(np.asarray(out), ref, rtol=1e-5, atol=1e-5)

    print("KERNEL_OK")
</pallas_src>

<mosaic_0001>
module attributes {stable_mosaic.version = 11 : i64} {
  func.func @fold_kernel(%arg0: i32, %arg1: memref<1x28x28xf32, #tpu.memory_space<vmem>>, %arg2: memref<16x28xf32, #tpu.memory_space<vmem>>, %arg3: memref<28x16xf32, #tpu.memory_space<vmem>>, %arg4: memref<16x16xf32, #tpu.memory_space<vmem>>, %arg5: memref<1x16x16xf32, #tpu.memory_space<vmem>>) attributes {dimension_semantics = [#tpu.dimension_semantics<parallel>], iteration_bounds = array<i64: 2>, scalar_prefetch = 0 : i64, scratch_operands = 0 : i64, tpu.core_type = #tpu.core_type<tc>, window_params = [{transform_indices = @transform_0, window_bounds = array<i64: 1, 28, 28>}, {pipeline_mode = #tpu.pipeline_mode<synchronous>, transform_indices = @transform_1, window_bounds = array<i64: 16, 28>}, {pipeline_mode = #tpu.pipeline_mode<synchronous>, transform_indices = @transform_2, window_bounds = array<i64: 28, 16>}, {pipeline_mode = #tpu.pipeline_mode<synchronous>, transform_indices = @transform_3, window_bounds = array<i64: 16, 16>}, {transform_indices = @transform_4, window_bounds = array<i64: 1, 16, 16>}]} {
    %c0 = arith.constant 0 : index
    %c0_0 = arith.constant 0 : index
    %0 = vector.load %arg2[%c0, %c0_0] : memref<16x28xf32, #tpu.memory_space<vmem>>, vector<16x28xf32>
    %c0_1 = arith.constant 0 : index
    %c0_2 = arith.constant 0 : index
    %c0_3 = arith.constant 0 : index
    %1 = vector.load %arg1[%c0_1, %c0_2, %c0_3] : memref<1x28x28xf32, #tpu.memory_space<vmem>>, vector<1x28x28xf32>
    %2 = vector.shape_cast %1 : vector<1x28x28xf32> to vector<28x28xf32>
    %cst = arith.constant dense<0.000000e+00> : vector<16x28xf32>
    %3 = tpu.matmul %0, %2, %cst {dimension_numbers = #tpu.dot_dimension_numbers<[1], [0], [0], [1], [0, 0, 1, 1], [], []>} : vector<16x28xf32>, vector<28x28xf32>, vector<16x28xf32> -> vector<16x28xf32>
    %c0_4 = arith.constant 0 : index
    %c0_5 = arith.constant 0 : index
    %4 = vector.load %arg3[%c0_4, %c0_5] : memref<28x16xf32, #tpu.memory_space<vmem>>, vector<28x16xf32>
    %cst_6 = arith.constant dense<0.000000e+00> : vector<16x16xf32>
    %5 = tpu.matmul %3, %4, %cst_6 {dimension_numbers = #tpu.dot_dimension_numbers<[1], [0], [0], [1], [0, 0, 1, 1], [], []>} : vector<16x28xf32>, vector<28x16xf32>, vector<16x16xf32> -> vector<16x16xf32>
    %c0_7 = arith.constant 0 : index
    %c0_8 = arith.constant 0 : index
    %6 = vector.load %arg4[%c0_7, %c0_8] : memref<16x16xf32, #tpu.memory_space<vmem>>, vector<16x16xf32>
    %7 = arith.mulf %5, %6 : vector<16x16xf32>
    %c0_9 = arith.constant 0 : index
    %c0_10 = arith.constant 0 : index
    %c0_11 = arith.constant 0 : index
    %8 = vector.load %arg5[%c0_9, %c0_10, %c0_11] : memref<1x16x16xf32, #tpu.memory_space<vmem>>, vector<1x16x16xf32>
    %9 = vector.shape_cast %8 : vector<1x16x16xf32> to vector<16x16xf32>
    %10 = vector.shape_cast %7 : vector<16x16xf32> to vector<1x16x16xf32>
    tpu.vector_store %arg5[%c0_9, %c0_10, %c0_11], %10 {strides = array<i32>} : memref<1x16x16xf32, #tpu.memory_space<vmem>>, vector<1x16x16xf32>,
    return
  }
  func.func @transform_0(%arg0: i32) -> (i32, i32, i32) {
    %c0_i32 = arith.constant 0 : i32
    %c0_i32_0 = arith.constant 0 : i32
    %c0_i32_1 = arith.constant 0 : i32
    return %arg0, %c0_i32, %c0_i32_0 : i32, i32, i32
  }
  func.func @transform_1(%arg0: i32) -> (i32, i32) {
    %c0_i32 = arith.constant 0 : i32
    %c0_i32_0 = arith.constant 0 : i32
    %c0_i32_1 = arith.constant 0 : i32
    return %c0_i32, %c0_i32_0 : i32, i32
  }
  func.func @transform_2(%arg0: i32) -> (i32, i32) {
    %c0_i32 = arith.constant 0 : i32
    %c0_i32_0 = arith.constant 0 : i32
    %c0_i32_1 = arith.constant 0 : i32
    return %c0_i32, %c0_i32_0 : i32, i32
  }
  func.func @transform_3(%arg0: i32) -> (i32, i32) {
    %c0_i32 = arith.constant 0 : i32
    %c0_i32_0 = arith.constant 0 : i32
    %c0_i32_1 = arith.constant 0 : i32
    return %c0_i32, %c0_i32_0 : i32, i32
  }
  func.func @transform_4(%arg0: i32) -> (i32, i32, i32) {
    %c0_i32 = arith.constant 0 : i32
    %c0_i32_0 = arith.constant 0 : i32
    %c0_i32_1 = arith.constant 0 : i32
    return %arg0, %c0_i32, %c0_i32_0 : i32, i32, i32
  }
}

</mosaic_0001>

<llo_original>
// kernel: tpu_custom_call.1
$region0: #{tpu_custom_call.1}
  #allocation0 [shape = 'u32[]', space=smem, size = 0x4, offset = 0x4, fixed_abs, tag = 'smem constant byte address 0x4 - core index']
  #allocation1 [shape = 'u32[72,128]{1,0:T(1,128)}', space=vmem, size = 0x9000, scoped, tag = 'internal scratch']
  %s0 = inlined_call_operand.vmem [shape: f32[2,28,28], index: 0, kind: input, shape index: {}]
  %s1 = inlined_call_operand.vmem [shape: f32[16,28], index: 1, kind: input, shape index: {}]
  %s2 = inlined_call_operand.vmem [shape: f32[28,16], index: 2, kind: input, shape index: {}]
  %s3 = inlined_call_operand.vmem [shape: f32[16,16], index: 3, kind: input, shape index: {}]
  %s4 = inlined_call_operand.hbm [shape: f32[2,16,16], index: 4, kind: output, shape index: {}]
  %s5 = sld [smem:[#allocation0]]
  $region49: #{tpu_custom_call.1} parent=0
    _
  %s7 = ssub.s32 1, %s5
  %s8 = scalar_select 0, %s7, %s5
  $region1: #{tpu_custom_call.1} parent=0
    #allocation2 [shape = 'u8[16384]{0}', space=vmem, size = 0x4000, scoped, tag = 'output window, operand 0']
    #allocation3 [shape = 's32[2]{0}', space=sflag, size = 0x8, scoped, tag = 'scoped memory for tpu_custom_call.1']
    %9 = vsyncpa [#allocation3], 0
    %s10 = scalar_lea.sflag [#allocation3], 1
    %11 = vsyncpa %s10, 0
    loop: start=0, step=1, limit=4
    $region2: #{tpu_custom_call.1} parent=1 // loop_pre_header
      _
    $region3: #{tpu_custom_call.1} parent=1 // loop_header
      %s13 = sphi 0, %s17
      %p14 = scmp.ge.s32.totalorder %s13, 4
      %s23 = sphi 0, %s25
      %s26 = sphi 0, %s23
      %s27 = sphi 0, %s26
      %s43 = sphi 0, %s27
      %s47 = sphi 0, %s47
      %s49 = sphi 0, %s47
      %s50 = sphi 0, %s49
      %s64 = sphi 0, %s50
      %s68 = sphi 0, %s68
      %s70 = sphi 0, %s68
      %s71 = sphi 0, %s70
      %s85 = sphi 0, %s71
      %s89 = sphi 0, %s89
      %s91 = sphi 0, %s89
      %s92 = sphi 0, %s91
      %s106 = sphi 0, %s92
      %s112 = sphi 0, %s114
      %s115 = sphi 0, %s112
      %s116 = sphi 0, %s115
      %s132 = sphi 0, %s116
    $region4: #{tpu_custom_call.1} parent=1 // loop_header_branch
      %16 = sbr.rel (%p14) target = $region8
    $region5: #{tpu_custom_call.1} parent=1 // loop_body
      %s18 = ssub.s32 %s13, 1
      %s19 = ssub.s32 %s13, 2
      %s20 = sadd.s32 %s13, 1
      %s21 = ssub.s32 %s13, %s20
      %p22 = scmp.eq.s32.totalorder %s21, 0
      %s24 = sadd.s32 %s23, 1
      %s25 = scalar_select %p22, %s23, %s24
      %p28 = pneg %p22
      %p29 = scmp.eq.s32.totalorder %s13, 1
      %p30 = por %p28, %p29
      %p31 = scmp.ne.s32.totalorder %s23, %s26
      %p32 = scmp.eq.s32.totalorder %s13, 0
      %p33 = por %p31, %p32
      %p34 = scmp.ne.s32.totalorder %s23, %s26
      %p35 = scmp.eq.s32.totalorder %s18, 1
      %p36 = por %p34, %p35
      %p37 = scmp.ne.s32.totalorder %s26, %s27
      %p38 = scmp.eq.s32.totalorder %s18, 0
      %p39 = por %p37, %p38
      %p40 = scmp.ne.s32.totalorder %s26, %s27
      %p41 = scmp.eq.s32.totalorder %s19, 1
      %p42 = por %p40, %p41
      %p44 = scmp.ne.s32.totalorder %s27, %s43
      %p45 = scmp.eq.s32.totalorder %s19, 0
      %p46 = por %p44, %p45
      %s48 = sadd.s32 %s47, 1
      %p51 = scmp.eq.s32.totalorder %s13, 1
      %p52 = scmp.ne.s32.totalorder %s47, %s49
      %p53 = scmp.eq.s32.totalorder %s13, 0
      %p54 = por %p52, %p53
      %p55 = scmp.ne.s32.totalorder %s47, %s49
      %p56 = scmp.eq.s32.totalorder %s18, 1
      %p57 = por %p55, %p56
      %p58 = scmp.ne.s32.totalorder %s49, %s50
      %p59 = scmp.eq.s32.totalorder %s18, 0
      %p60 = por %p58, %p59
      %p61 = scmp.ne.s32.totalorder %s49, %s50
      %p62 = scmp.eq.s32.totalorder %s19, 1
      %p63 = por %p61, %p62
      %p65 = scmp.ne.s32.totalorder %s50, %s64
      %p66 = scmp.eq.s32.totalorder %s19, 0
      %p67 = por %p65, %p66
      %s69 = sadd.s32 %s68, 1
      %p72 = scmp.eq.s32.totalorder %s13, 1
      %p73 = scmp.ne.s32.totalorder %s68, %s70
      %p74 = scmp.eq.s32.totalorder %s13, 0
      %p75 = por %p73, %p74
      %p76 = scmp.ne.s32.totalorder %s68, %s70
      %p77 = scmp.eq.s32.totalorder %s18, 1
      %p78 = por %p76, %p77
      %p79 = scmp.ne.s32.totalorder %s70, %s71
      %p80 = scmp.eq.s32.totalorder %s18, 0
      %p81 = por %p79, %p80
      %p82 = scmp.ne.s32.totalorder %s70, %s71
      %p83 = scmp.eq.s32.totalorder %s19, 1
      %p84 = por %p82, %p83
      %p86 = scmp.ne.s32.totalorder %s71, %s85
      %p87 = scmp.eq.s32.totalorder %s19, 0
      %p88 = por %p86, %p87
      %s90 = sadd.s32 %s89, 1
      %p93 = scmp.eq.s32.totalorder %s13, 1
      %p94 = scmp.ne.s32.totalorder %s89, %s91
      %p95 = scmp.eq.s32.totalorder %s13, 0
      %p96 = por %p94, %p95
      %p97 = scmp.ne.s32.totalorder %s89, %s91
      %p98 = scmp.eq.s32.totalorder %s18, 1
      %p99 = por %p97, %p98
      %p100 = scmp.ne.s32.totalorder %s91, %s92
      %p101 = scmp.eq.s32.totalorder %s18, 0
      %p102 = por %p100, %p101
      %p103 = scmp.ne.s32.totalorder %s91, %s92
      %p104 = scmp.eq.s32.totalorder %s19, 1
      %p105 = por %p103, %p104
      %p107 = scmp.ne.s32.totalorder %s92, %s106
      %p108 = scmp.eq.s32.totalorder %s19, 0
      %p109 = por %p107, %p108
      %s110 = ssub.s32 %s13, %s20
      %p111 = scmp.eq.s32.totalorder %s110, 0
      %s113 = sadd.s32 %s112, 1
      %s114 = scalar_select %p111, %s112, %s113
      %p117 = pneg %p111
      %p118 = scmp.eq.s32.totalorder %s13, 1
      %p119 = por %p117, %p118
      %p120 = scmp.ne.s32.totalorder %s112, %s115
      %p121 = scmp.eq.s32.totalorder %s13, 0
      %p122 = por %p120, %p121
      %p123 = scmp.ne.s32.totalorder %s112, %s115
      %p124 = scmp.eq.s32.totalorder %s18, 1
      %p125 = por %p123, %p124
      %p126 = scmp.ne.s32.totalorder %s115, %s116
      %p127 = scmp.eq.s32.totalorder %s18, 0
      %p128 = por %p126, %p127
      %p129 = scmp.ne.s32.totalorder %s115, %s116
      %p130 = scmp.eq.s32.totalorder %s19, 1
      %p131 = por %p129, %p130
      %p133 = scmp.ne.s32.totalorder %s116, %s132
      %p134 = scmp.eq.s32.totalorder %s19, 0
      %p135 = por %p133, %p134
      %p136 = scmp.le.s32.totalorder 1, %s13
      %p137 = scmp.lt.s32.totalorder %s13, 3
      %p138 = pnand %p136, %p137
      %p139 = pneg %p138
      // Predicated region
      $region9: #{tpu_custom_call.1} parent=5 // pred_check
        _
      $region10: #{tpu_custom_call.1} parent=5 // pred_check_branch
        %141 = sbr.rel (%p138) target = $region12
      $region11: #{tpu_custom_call.1} parent=5 // pred_region
        %s142 = ssub.s32 %s13, 1
        // Predicated region
        $region13: #{tpu_custom_call.1} parent=11 // pred_check
          %p143 = pneg %p60
        $region14: #{tpu_custom_call.1} parent=11 // pred_check_branch
          %145 = sbr.rel (%p143) target = $region16
        $region15: #{tpu_custom_call.1} parent=11 // pred_region
          _
        $region16: #{tpu_custom_call.1} parent=11 // pred_fallthru
          _
        // Predicated region
        $region17: #{tpu_custom_call.1} parent=11 // pred_check
          %p146 = pneg %p81
        $region18: #{tpu_custom_call.1} parent=11 // pred_check_branch
          %148 = sbr.rel (%p146) target = $region20
        $region19: #{tpu_custom_call.1} parent=11 // pred_region
          _
        $region20: #{tpu_custom_call.1} parent=11 // pred_fallthru
          _
        // Predicated region
        $region21: #{tpu_custom_call.1} parent=11 // pred_check
          %p149 = pneg %p102
        $region22: #{tpu_custom_call.1} parent=11 // pred_check_branch
          %151 = sbr.rel (%p149) target = $region24
        $region23: #{tpu_custom_call.1} parent=11 // pred_region
          _
        $region24: #{tpu_custom_call.1} parent=11 // pred_fallthru
          _
      $region12: #{tpu_custom_call.1} parent=5 // pred_fallthru
        _
      %p152 = scmp.lt.s32.totalorder %s13, 2
      // Predicated region
      $region25: #{tpu_custom_call.1} parent=5 // pred_check
        %p153 = pneg %p152
      $region26: #{tpu_custom_call.1} parent=5 // pred_check_branch
        %155 = sbr.rel (%p153) target = $region28
      $region27: #{tpu_custom_call.1} parent=5 // pred_region
        // Predicated region
        $region29: #{tpu_custom_call.1} parent=27 // pred_check
          %p156 = pneg %p33
        $region30: #{tpu_custom_call.1} parent=27 // pred_check_branch
          %158 = sbr.rel (%p156) target = $region32
        $region31: #{tpu_custom_call.1} parent=27 // pred_region
          %p159 = scmp.lt.s32.totalorder %s13, 1
          %s160 = scalar_select %p159, %s13, 1
          %s161 = smul.addr %s160, 4
          %s162 = smul.addr %s161, 8
          %s163 = scalar_lea.vmem %s0, %s162
        $region32: #{tpu_custom_call.1} parent=27 // pred_fallthru
          _
      $region28: #{tpu_custom_call.1} parent=5 // pred_fallthru
        _
      %p164 = scmp.le.s32.totalorder 1, %s13
      %p165 = scmp.lt.s32.totalorder %s13, 3
      %p166 = pnand %p164, %p165
      %p167 = pneg %p166
      // Predicated region
      $region33: #{tpu_custom_call.1} parent=5 // pred_check
        _
      $region34: #{tpu_custom_call.1} parent=5 // pred_check_branch
        %169 = sbr.rel (%p166) target = $region36
      $region35: #{tpu_custom_call.1} parent=5 // pred_region
        %s170 = ssub.s32 %s13, 1
        %p171 = scmp.lt.s32.totalorder %s18, 1
        %s172 = scalar_select %p171, %s18, 1
        %s173 = smul.addr %s172, 4
        %s174 = smul.addr %s173, 8
        %s175 = scalar_lea.vmem %s0, %s174
        %p176 = pneg %p39
        %p177 = pneg %p36
        %p178 = pneg %p60
        %p179 = pneg %p57
        %p180 = pneg %p81
        %p181 = pneg %p78
        %p182 = pneg %p102
        %p183 = pneg %p99
        %p184 = pneg %p128
        %p185 = pneg %p125
        %s186 = sand.u32 %s115, 1
        %s187 = scalar_lea.sflag [#allocation3], %s186
        %s188 = sand.u32 %s115, 1
        %s189 = smul.addr %s188, 16
        %s190 = scalar_lea.vmem [#allocation2], %s189
        %p191 = scmp.lt.s32.totalorder %s18, 1
        %s192 = scalar_select %p191, %s18, 1
        %s193 = smul.addr %s192, 4
        %s194 = smul.addr %s193, 8
        %s195 = scalar_lea.vmem %s0, %s194
        %v196 = vld [vmem:[%s1] sm:$0xff]
        %v197 = vld [vmem:[%s1 + $0x8] sm:$0xff]
        %v198 = vld [vmem:[%s195] sm:$0xff]
        %v199 = vld [vmem:[%s195 + $0x8] sm:$0xff]
        %v200 = vld [vmem:[%s195 + $0x10] sm:$0xff]
        %v201 = vld [vmem:[%s195 + $0x18] sm:$0xf]
        %vm202 = vcmask 228352
        %v204 = vsel %vm202, %v196, 0
        %v207 = vsel %vm202, %v197, 0
        %vm209 = vcmask 1043456
        %v211 = vsel %vm209, %v201, 0
        %213 = vmatpush.msra.mxu0 0.0
        %214 = vmatpush.msra.mxu0 0.0
        %215 = vmatpush.msra.mxu0 0.0
        %216 = vmatpush.msra.mxu0 0.0
        %217 = vmatpush.msra.mxu0 0.0
        %218 = vmatpush.msra.mxu0 0.0
        %219 = vmatpush.msra.mxu0 0.0
        %220 = vmatpush.msra.mxu0 0.0
        %221 = vmatpush.msra.mxu0 0.0
        %222 = vmatpush.msra.mxu0 0.0
        %223 = vmatpush.msra.mxu0 0.0
        %224 = vmatpush.msra.mxu0 0.0
        %225 = vmatpush.msra.mxu0 %v211
        %226 = vmatpush.msra.mxu0 %v200
        %227 = vmatpush.msra.mxu0 %v199
        %228 = vmatpush.msra.mxu0 %v198
        %229 = vmatmul.f32.gmra.mxu0 %v204
        %v230 = vpop.f32.mrf.mxu0
        %v231 = vadd.f32 0.0, %v230
        %232 = vmatmul.f32.gmra.mxu0 %v207
        %v233 = vpop.f32.mrf.mxu0
        %v234 = vadd.f32 0.0, %v233
        %235 = vdwg.mxu0
        %v236 = vld [vmem:[%s2] sm:$0xff]
        %v237 = vld [vmem:[%s2 + $0x8] sm:$0xff]
        %v238 = vld [vmem:[%s2 + $0x10] sm:$0xff]
        %v239 = vld [vmem:[%s2 + $0x18] sm:$0xf]
        %v241 = vsel %vm202, %v231, 0
        %v244 = vsel %vm202, %v234, 0
        %v247 = vsel %vm209, %v239, 0
        %249 = vmatpush.msra.mxu0 0.0
        %250 = vmatpush.msra.mxu0 0.0
        %251 = vmatpush.msra.mxu0 0.0
        %252 = vmatpush.msra.mxu0 0.0
        %253 = vmatpush.msra.mxu0 0.0
        %254 = vmatpush.msra.mxu0 0.0
        %255 = vmatpush.msra.mxu0 0.0
        %256 = vmatpush.msra.mxu0 0.0
        %257 = vmatpush.msra.mxu0 0.0
        %258 = vmatpush.msra.mxu0 0.0
        %259 = vmatpush.msra.mxu0 0.0
        %260 = vmatpush.msra.mxu0 0.0
        %261 = vmatpush.msra.mxu0 %v247
        %262 = vmatpush.msra.mxu0 %v238
        %263 = vmatpush.msra.mxu0 %v237
        %264 = vmatpush.msra.mxu0 %v236
        %265 = vmatmul.f32.gmra.mxu0 %v241
        %v266 = vpop.f32.mrf.mxu0
        %v267 = vadd.f32 0.0, %v266
        %268 = vmatmul.f32.gmra.mxu0 %v244
        %v269 = vpop.f32.mrf.mxu0
        %v270 = vadd.f32 0.0, %v269
        %271 = vdwg.mxu0
        %v272 = vld [vmem:[%s3] sm:$0xff]
        %v273 = vld [vmem:[%s3 + $0x8] sm:$0xff]
        %v274 = vmul.f32 %v267, %v272
        %v275 = vmul.f32 %v270, %v273
        %vm276 = vcmask 130048
        %277 = vst.msk [vmem:[%s190] sm:$0xff] %vm276, %v274
        %278 = vst.msk [vmem:[%s190 + $0x8] sm:$0xff] %vm276, %v275
        %s279 = sand.u32 %s115, 1
        %s280 = scalar_lea.sflag [#allocation3], %s279
        %s281 = sand.u32 %s115, 1
        %s282 = smul.addr %s281, 16
        %s283 = scalar_lea.vmem [#allocation2], %s282
        // Predicated region
        $region37: #{tpu_custom_call.1} parent=35 // pred_check
          %p284 = pneg %p125
        $region38: #{tpu_custom_call.1} parent=35 // pred_check_branch
          %286 = sbr.rel (%p284) target = $region40
        $region39: #{tpu_custom_call.1} parent=35 // pred_region
          %288 = vsyncadd %s280, 0
          %s289 = smul.addr %s18, 2
          %s290 = smul.addr %s289, 8
          %s291 = scalar_lea.hbm %s4, %s290
          %s292 = sshll.u32 %s283, 4
          %s293 = int_to_ptr.vmem [resolvable:$true] %s292
          %s294 = sshll.u32 %s291, 4
          %s295 = int_to_ptr.hbm [resolvable:$true] %s294
          %300 = dma.vmem_to_hbm [thread:$0]  %s293, 256, %s295, %s280, 128, 128, 8
        $region40: #{tpu_custom_call.1} parent=35 // pred_fallthru
          _
      $region36: #{tpu_custom_call.1} parent=5 // pred_fallthru
        _
      %p301 = scmp.le.s32.totalorder 2, %s13
      // Predicated region
      $region41: #{tpu_custom_call.1} parent=5 // pred_check
        %p302 = pneg %p301
      $region42: #{tpu_custom_call.1} parent=5 // pred_check_branch
        %304 = sbr.rel (%p302) target = $region44
      $region43: #{tpu_custom_call.1} parent=5 // pred_region
        %s305 = ssub.s32 %s13, 2
        // Predicated region
        $region45: #{tpu_custom_call.1} parent=43 // pred_check
          %p306 = pneg %p131
        $region46: #{tpu_custom_call.1} parent=43 // pred_check_branch
          %308 = sbr.rel (%p306) target = $region48
        $region47: #{tpu_custom_call.1} parent=43 // pred_region
          %s309 = sand.u32 %s116, 1
          %s310 = scalar_lea.sflag [#allocation3], %s309
          %s311 = sand.u32 %s116, 1
          %s312 = smul.addr %s311, 16
          %s313 = scalar_lea.vmem [#allocation2], %s312
          %315 = dma.done %s310, 256
        $region48: #{tpu_custom_call.1} parent=43 // pred_fallthru
          _
      $region44: #{tpu_custom_call.1} parent=5 // pred_fallthru
        _
    $region6: #{tpu_custom_call.1} parent=1 // loop_footer
      %s17 = sadd.s32 1, %s13
    $region7: #{tpu_custom_call.1} parent=1 // loop_footer_branch
      %12 = sbr.rel target = $region3
    $region8: #{tpu_custom_call.1} parent=1 // loop_exit
      _
    %316 = vsyncpa [#allocation3], 1
    %s317 = scalar_lea.sflag [#allocation3], 1
    %318 = vsyncpa %s317, 1

</llo_original>
